<compile_context>
chip_gen: v7x
topology: tpu7x:2x2x1
jax: 0.10.0
libtpu: 0.0.40
codegen_flags: <defaults>
</compile_context>

<pallas_src>
import functools

import jax
import jax.numpy as jnp
from jax.experimental import pallas as pl
from jax.experimental.pallas import tpu as pltpu

_LANES = 128
_SUBLANES = 8
_ROW_ALIGN = 32  # keeps bf16 (16,128) tiling aligned for the y input


def _mse_decorr_kernel(out_ref, y_ref, b0_ref, partial_ref,
                       *, c, block_rows, n_last, mask_last):
    o = out_ref[...]        # (bm, 128) f32, model probability for class 0
    y = y_ref[...]          # (bm, 128) bf16, binary label
    b0 = b0_ref[...]        # (bm, 128) f32, bookmaker prob for class 0

    # ---- BCELoss(reduction='none') with a single log -----------------------
    # y is binary, so -(y*log(o) + (1-y)*log(1-o)) == -log(o if y==1 else 1-o).
    # PyTorch clamps the log term at -100.
    o_sel = jnp.where(y > 0.5, o, 1.0 - o)
    bce = -jnp.maximum(jnp.log(o_sel), -100.0)

    # ---- model probability for class 0 --------------------------------------
    # For o in [0,1]: |o+1e-3| + |1-o+1e-3| == 1.002 exactly.
    p0 = (o + 0.001) * jnp.float32(1.0 / 1.002)

    # ---- per-element loss ----------------------------------------------------
    diff = p0 - b0
    losses = bce - c * diff * diff                             # (bm, 128)

    def _fold(x):
        # Lane-dense per-tile partial sum: fold sublane groups down to (8, 128).
        return jnp.sum(
            x.reshape(block_rows // _SUBLANES, _SUBLANES, _LANES),
            axis=0).reshape(1, _SUBLANES, _LANES)

    if mask_last:
        is_last = pl.program_id(0) == pl.num_programs(0) - 1

        @pl.when(jnp.logical_not(is_last))
        def _():
            partial_ref[...] = _fold(losses)

        @pl.when(is_last)
        def _():
            # Tile-local flat index; all padding lives in the last tile.
            row = jax.lax.broadcasted_iota(jnp.int32, losses.shape, 0)
            lane = jax.lax.broadcasted_iota(jnp.int32, losses.shape, 1)
            flat = row * _LANES + lane
            partial_ref[...] = _fold(jnp.where(flat < n_last, losses, 0.0))
    else:
        partial_ref[...] = _fold(losses)


def _round_up(x, m):
    return -(-int(x) // m) * m


def mse_decorrelation_loss(output, y, odds, c, *, block_rows=2048):
    """Pallas implementation of MSEDecorrelationLoss.forward -> scalar."""
    n = int(output.shape[0])

    out_f = output.reshape(-1).astype(jnp.float32)
    y_f = y.reshape(-1).astype(jnp.bfloat16)          # binary labels: exact

    # Bookmaker probability for class 0, exactly mirroring
    # f.normalize(1/odds, p=1, dim=1)[:, 0]. Cheap wrapper-side elementwise
    # chain; drops one full input stream + 2 reciprocals from the kernel.
    inv = 1.0 / odds.astype(jnp.float32)
    b0_f = inv[:, 0] / jnp.maximum(
        jnp.abs(inv[:, 0]) + jnp.abs(inv[:, 1]), 1e-12)
    b0_f = b0_f.reshape(-1)

    # Lane-dense layout: pad to whole (bm, 128) tiles, bm a multiple of 32.
    rows_needed = pl.cdiv(n, _LANES)
    rows_rounded = _round_up(rows_needed, _ROW_ALIGN)
    bm = min(int(block_rows), rows_rounded)
    bm = _round_up(bm, _ROW_ALIGN)
    # If one tile would cover everything, split in two so the "parallel" grid
    # axis can occupy both v7x TensorCores (VMEM is not the constraint).
    if rows_rounded >= 2 * _ROW_ALIGN and bm >= rows_rounded:
        bm = _round_up(rows_rounded // 2, _ROW_ALIGN)
    n_tiles = pl.cdiv(rows_rounded, bm)
    total_rows = n_tiles * bm
    padded = total_rows * _LANES
    pad = padded - n
    # All padding lands in the last tile (bm, rows_rounded multiples of 32).
    n_last = n - (n_tiles - 1) * bm * _LANES

    def _pad_reshape(x, fill):
        if pad:
            x = jnp.concatenate([x, jnp.full((pad,), fill, dtype=x.dtype)])
        return x.reshape(total_rows, _LANES)

    # Padding values keep every intermediate finite; the kernel masks them out.
    out2 = _pad_reshape(out_f, jnp.float32(0.5))
    y2 = _pad_reshape(y_f, jnp.bfloat16(0.0))
    b02 = _pad_reshape(b0_f, jnp.float32(0.5))

    kernel = functools.partial(
        _mse_decorr_kernel, c=float(c), block_rows=bm,
        n_last=int(n_last), mask_last=bool(pad))

    f32_spec = pl.BlockSpec((bm, _LANES), lambda i: (i, 0))
    y_spec = pl.BlockSpec((bm, _LANES), lambda i: (i, 0))
    partials = pl.pallas_call(
        kernel,
        out_shape=jax.ShapeDtypeStruct(
            (n_tiles, _SUBLANES, _LANES), jnp.float32),
        grid=(n_tiles,),
        in_specs=[f32_spec, y_spec, f32_spec],
        out_specs=pl.BlockSpec((1, _SUBLANES, _LANES), lambda i: (i, 0, 0)),
        compiler_params=pltpu.CompilerParams(
            dimension_semantics=("parallel",),
            allow_input_fusion=[True, True, True]),
    )(out2, y2, b02)

    return jnp.sum(partials) / jnp.float32(n)


def _reference(output, y, odds, c):
    """Pure-JAX reference mirroring the PyTorch forward exactly."""
    n = y.shape[0]
    log_o = jnp.maximum(jnp.log(output), -100.0)
    log_1mo = jnp.maximum(jnp.log(1.0 - output), -100.0)
    result_distances = -(y * log_o + (1.0 - y) * log_1mo)       # (N, 1)

    probs = jnp.concatenate(
        [output[:, 0:1] + 0.001, 1.0 - output[:, 0:1] + 0.001], axis=1)
    probs = probs / jnp.maximum(
        jnp.sum(jnp.abs(probs), axis=1, keepdims=True), 1e-12)
    booker = 1.0 / odds
    booker = booker / jnp.maximum(
        jnp.sum(jnp.abs(booker), axis=1, keepdims=True), 1e-12)

    p0 = probs[:, 0:1].reshape(n, 1)
    b0 = booker[:, 0:1].reshape(n, 1)
    pwr = (p0 - b0) ** 2
    return jnp.mean(result_distances - c * pwr)


if __name__ == "__main__":
    key = jax.random.PRNGKey(0)
    k1, k2, k3 = jax.random.split(key, 3)

    n = 8
    c = 0.5

    # Model probabilities in (0, 1), binary labels, bookmaker odds in [1.5, 3].
    output = jax.nn.sigmoid(jax.random.normal(k1, (n, 1), dtype=jnp.float32))
    y = jax.random.bernoulli(k2, 0.5, (n, 1)).astype(jnp.float32)
    odds = jax.random.uniform(
        k3, (n, 2), dtype=jnp.float32, minval=1.5, maxval=3.0)

    loss = jax.block_until_ready(mse_decorrelation_loss(output, y, odds, c))
    ref = jax.block_until_ready(_reference(output, y, odds, c))
    assert jnp.allclose(loss, ref, rtol=1e-5, atol=1e-6), (loss, ref)

    # Exercise the multi-tile path + last-tile-only padding mask.
    k4, k5, k6 = jax.random.split(jax.random.PRNGKey(1), 3)
    n2 = 10000
    output2 = jax.nn.sigmoid(jax.random.normal(k4, (n2, 1), dtype=jnp.float32))
    y2 = jax.random.bernoulli(k5, 0.5, (n2, 1)).astype(jnp.float32)
    odds2 = jax.random.uniform(
        k6, (n2, 2), dtype=jnp.float32, minval=1.5, maxval=3.0)
    loss2 = jax.block_until_ready(
        mse_decorrelation_loss(output2, y2, odds2, c, block_rows=32))
    ref2 = jax.block_until_ready(_reference(output2, y2, odds2, c))
    assert jnp.allclose(loss2, ref2, rtol=1e-4, atol=1e-5), (loss2, ref2)

    # Default block_rows (single-split tile pair) on a mid-size N.
    loss3 = jax.block_until_ready(
        mse_decorrelation_loss(output2, y2, odds2, c))
    assert jnp.allclose(loss3, ref2, rtol=1e-4, atol=1e-5), (loss3, ref2)

    print("KERNEL_OK")
</pallas_src>

<mosaic_0001>
module attributes {stable_mosaic.version = 11 : i64} {
  func.func @_mse_decorr_kernel(%arg0: i32, %arg1: memref<32x128xf32, #tpu.memory_space<vmem>>, %arg2: memref<32x128xbf16, #tpu.memory_space<vmem>>, %arg3: memref<32x128xf32, #tpu.memory_space<vmem>>, %arg4: memref<1x8x128xf32, #tpu.memory_space<vmem>>) attributes {dimension_semantics = [#tpu.dimension_semantics<parallel>], iteration_bounds = array<i64: 1>, scalar_prefetch = 0 : i64, scratch_operands = 0 : i64, tpu.core_type = #tpu.core_type<tc>, window_params = [{transform_indices = @transform_0, window_bounds = array<i64: 32, 128>}, {transform_indices = @transform_1, window_bounds = array<i64: 32, 128>}, {transform_indices = @transform_2, window_bounds = array<i64: 32, 128>}, {transform_indices = @transform_3, window_bounds = array<i64: 1, 8, 128>}]} {
    %c0 = arith.constant 0 : index
    %c0_0 = arith.constant 0 : index
    %0 = vector.load %arg1[%c0, %c0_0] : memref<32x128xf32, #tpu.memory_space<vmem>>, vector<32x128xf32>
    %c0_1 = arith.constant 0 : index
    %c0_2 = arith.constant 0 : index
    %1 = vector.load %arg2[%c0_1, %c0_2] : memref<32x128xbf16, #tpu.memory_space<vmem>>, vector<32x128xbf16>
    %c0_3 = arith.constant 0 : index
    %c0_4 = arith.constant 0 : index
    %2 = vector.load %arg3[%c0_3, %c0_4] : memref<32x128xf32, #tpu.memory_space<vmem>>, vector<32x128xf32>
    %cst = arith.constant 5.000000e-01 : bf16
    %3 = vector.broadcast %cst : bf16 to vector<32x128xbf16>
    %4 = arith.cmpf ogt, %1, %3 : vector<32x128xbf16>
    %cst_5 = arith.constant 1.000000e+00 : f32
    %5 = vector.broadcast %cst_5 : f32 to vector<32x128xf32>
    %6 = arith.subf %5, %0 : vector<32x128xf32>
    %7 = arith.select %4, %0, %6 : vector<32x128xi1>, vector<32x128xf32>
    %8 = math.log %7 : vector<32x128xf32>
    %cst_6 = arith.constant -1.000000e+02 : f32
    %9 = vector.broadcast %cst_6 : f32 to vector<32x128xf32>
    %10 = arith.maximumf %8, %9 : vector<32x128xf32>
    %cst_7 = arith.constant 0.000000e+00 : f32
    %11 = vector.broadcast %cst_7 : f32 to vector<32x128xf32>
    %12 = arith.subf %11, %10 : vector<32x128xf32>
    %cst_8 = arith.constant 1.000000e-03 : f32
    %13 = vector.broadcast %cst_8 : f32 to vector<32x128xf32>
    %14 = arith.addf %0, %13 : vector<32x128xf32>
    %cst_9 = arith.constant 9.980040e-01 : f32
    %15 = vector.broadcast %cst_9 : f32 to vector<32x128xf32>
    %16 = arith.mulf %14, %15 : vector<32x128xf32>
    %17 = arith.subf %16, %2 : vector<32x128xf32>
    %cst_10 = arith.constant 5.000000e-01 : f32
    %18 = vector.broadcast %cst_10 : f32 to vector<32x128xf32>
    %19 = arith.mulf %18, %17 : vector<32x128xf32>
    %20 = arith.mulf %19, %17 : vector<32x128xf32>
    %21 = arith.subf %12, %20 : vector<32x128xf32>
    %c0_i32 = arith.constant 0 : i32
    %22 = arith.cmpi eq, %arg0, %c0_i32 : i32
    %true = arith.constant true
    %23 = arith.xori %22, %true : i1
    %24 = arith.extui %23 : i1 to i32
    %c0_i32_11 = arith.constant 0 : i32
    %25 = arith.cmpi ne, %24, %c0_i32_11 : i32
    scf.if %25 {
      %28 = vector.shape_cast %21 : vector<32x128xf32> to vector<4x8x128xf32>
      %cst_13 = arith.constant dense<0.000000e+00> : vector<8x128xf32>
      %29 = vector.multi_reduction <add>, %28, %cst_13 [0] : vector<4x8x128xf32> to vector<8x128xf32>
      %30 = vector.shape_cast %29 : vector<8x128xf32> to vector<1x8x128xf32>
      %c0_14 = arith.constant 0 : index
      %c0_15 = arith.constant 0 : index
      %c0_16 = arith.constant 0 : index
      %31 = vector.load %arg4[%c0_14, %c0_15, %c0_16] : memref<1x8x128xf32, #tpu.memory_space<vmem>>, vector<1x8x128xf32>
      tpu.vector_store %arg4[%c0_14, %c0_15, %c0_16], %30 {strides = array<i32>} : memref<1x8x128xf32, #tpu.memory_space<vmem>>, vector<1x8x128xf32>,
    } else {
    }
    %26 = arith.extui %22 : i1 to i32
    %c0_i32_12 = arith.constant 0 : i32
    %27 = arith.cmpi ne, %26, %c0_i32_12 : i32
    scf.if %27 {
      %28 = tpu.iota {dimensions = array<i32: 0>} : vector<32x128xi32>
      %29 = tpu.iota {dimensions = array<i32: 1>} : vector<32x128xi32>
      %c128_i32 = arith.constant 128 : i32
      %30 = vector.broadcast %c128_i32 : i32 to vector<32x128xi32>
      %31 = arith.muli %28, %30 : vector<32x128xi32>
      %32 = arith.addi %31, %29 : vector<32x128xi32>
      %c8_i32 = arith.constant 8 : i32
      %33 = vector.broadcast %c8_i32 : i32 to vector<32x128xi32>
      %34 = arith.cmpi slt, %32, %33 : vector<32x128xi32>
      %cst_13 = arith.constant 0.000000e+00 : f32
      %35 = vector.broadcast %cst_13 : f32 to vector<32x128xf32>
      %36 = arith.select %34, %21, %35 : vector<32x128xi1>, vector<32x128xf32>
      %37 = vector.shape_cast %36 : vector<32x128xf32> to vector<4x8x128xf32>
      %cst_14 = arith.constant dense<0.000000e+00> : vector<8x128xf32>
      %38 = vector.multi_reduction <add>, %37, %cst_14 [0] : vector<4x8x128xf32> to vector<8x128xf32>
      %39 = vector.shape_cast %38 : vector<8x128xf32> to vector<1x8x128xf32>
      %c0_15 = arith.constant 0 : index
      %c0_16 = arith.constant 0 : index
      %c0_17 = arith.constant 0 : index
      %40 = vector.load %arg4[%c0_15, %c0_16, %c0_17] : memref<1x8x128xf32, #tpu.memory_space<vmem>>, vector<1x8x128xf32>
      tpu.vector_store %arg4[%c0_15, %c0_16, %c0_17], %39 {strides = array<i32>} : memref<1x8x128xf32, #tpu.memory_space<vmem>>, vector<1x8x128xf32>,
    } else {
    }
    return
  }
  func.func @transform_0(%arg0: i32) -> (i32, i32) {
    %c0_i32 = arith.constant 0 : i32
    %c0_i32_0 = arith.constant 0 : i32
    return %arg0, %c0_i32 : i32, i32
  }
  func.func @transform_1(%arg0: i32) -> (i32, i32) {
    %c0_i32 = arith.constant 0 : i32
    %c0_i32_0 = arith.constant 0 : i32
    return %arg0, %c0_i32 : i32, i32
  }
  func.func @transform_2(%arg0: i32) -> (i32, i32) {
    %c0_i32 = arith.constant 0 : i32
    %c0_i32_0 = arith.constant 0 : i32
    return %arg0, %c0_i32 : i32, i32
  }
  func.func @transform_3(%arg0: i32) -> (i32, i32, i32) {
    %c0_i32 = arith.constant 0 : i32
    %c0_i32_0 = arith.constant 0 : i32
    %c0_i32_1 = arith.constant 0 : i32
    return %arg0, %c0_i32, %c0_i32_0 : i32, i32, i32
  }
}

</mosaic_0001>

<llo_original>
// kernel: tpu_custom_call.1
$region0: #{tpu_custom_call.1}
  #allocation0 [shape = 'u32[]', space=smem, size = 0x4, offset = 0x4, fixed_abs, tag = 'smem constant byte address 0x4 - core index']
  #allocation1 [shape = 'u32[144,128]{1,0:T(1,128)}', space=vmem, size = 0x12000, scoped, tag = 'internal scratch']
  %s0 = inlined_call_operand.hbm [shape: f32[32,128], index: 0, kind: input, shape index: {}]
  %s1 = inlined_call_operand.hbm [shape: bf16[32,128], index: 1, kind: input, shape index: {}]
  %s2 = inlined_call_operand.hbm [shape: f32[32,128], index: 2, kind: input, shape index: {}]
  %s3 = inlined_call_operand.hbm [shape: f32[1,8,128], index: 3, kind: output, shape index: {}]
  %s4 = sld [smem:[#allocation0]]
  $region42: #{tpu_custom_call.1} parent=0
    _
  %s6 = ssub.s32 1, %s4
  %s7 = scalar_select 0, %s6, %s4
  $region1: #{tpu_custom_call.1} parent=0
    #allocation2 [shape = 'u8[16384]{0}', space=vmem, size = 0x4000, scoped, tag = 'input window, operand 0, single buffered']
    #allocation3 [shape = 's32[1]{0}', space=sflag, size = 0x4, scoped, tag = 'scoped memory for tpu_custom_call.1']
    #allocation4 [shape = 's32[1]{0}', space=sflag, size = 0x4, scoped, tag = 'scoped memory for tpu_custom_call.1']
    #allocation5 [shape = 'u8[8192]{0}', space=vmem, size = 0x2000, scoped, tag = 'input window, operand 1, single buffered']
    #allocation6 [shape = 's32[1]{0}', space=sflag, size = 0x4, scoped, tag = 'scoped memory for tpu_custom_call.1']
    #allocation7 [shape = 'u8[16384]{0}', space=vmem, size = 0x4000, scoped, tag = 'input window, operand 2, single buffered']
    #allocation8 [shape = 'u8[4096]{0}', space=vmem, size = 0x1000, scoped, tag = 'output window, operand 0, single buffered']
    %8 = vsyncpa [#allocation3], 0
    %9 = vsyncpa [#allocation6], 0
    %10 = vsyncpa [#allocation4], 0
    // Predicated region
    $region2: #{tpu_custom_call.1} parent=1 // pred_check
      _
    $region3: #{tpu_custom_call.1} parent=1 // pred_check_branch
      %12 = sbr.rel (0) target = $region5
    $region4: #{tpu_custom_call.1} parent=1 // pred_region
      %s14 = ssub.s32 512, 512
      %15 = vsyncadd [#allocation3], %s14
      %s16 = sshll.u32 [#allocation2], 4
      %s17 = int_to_ptr.vmem [resolvable:$true] %s16
      %22 = dma.hbm_to_vmem [thread:$0]  %s0, 512, %s17, [#allocation3], 128, 128, 8
    $region5: #{tpu_custom_call.1} parent=1 // pred_fallthru
      _
    // Predicated region
    $region6: #{tpu_custom_call.1} parent=1 // pred_check
      _
    $region7: #{tpu_custom_call.1} parent=1 // pred_check_branch
      %24 = sbr.rel (0) target = $region9
    $region8: #{tpu_custom_call.1} parent=1 // pred_region
      %s26 = ssub.s32 256, 256
      %27 = vsyncadd [#allocation6], %s26
      %s28 = sshll.u32 [#allocation5], 4
      %s29 = int_to_ptr.vmem [resolvable:$true] %s28
      %34 = dma.hbm_to_vmem [thread:$0]  %s1, 256, %s29, [#allocation6], 64, 64, 4
    $region9: #{tpu_custom_call.1} parent=1 // pred_fallthru
      _
    // Predicated region
    $region10: #{tpu_custom_call.1} parent=1 // pred_check
      _
    $region11: #{tpu_custom_call.1} parent=1 // pred_check_branch
      %36 = sbr.rel (0) target = $region13
    $region12: #{tpu_custom_call.1} parent=1 // pred_region
      %s38 = ssub.s32 512, 512
      %39 = vsyncadd [#allocation6], %s38
      %s40 = sshll.u32 [#allocation7], 4
      %s41 = int_to_ptr.vmem [resolvable:$true] %s40
      %46 = dma.hbm_to_vmem [thread:$0]  %s2, 512, %s41, [#allocation6], 128, 128, 8
    $region13: #{tpu_custom_call.1} parent=1 // pred_fallthru
      _
    // Predicated region
    $region14: #{tpu_custom_call.1} parent=1 // pred_check
      _
    $region15: #{tpu_custom_call.1} parent=1 // pred_check_branch
      %48 = sbr.rel (0) target = $region17
    $region16: #{tpu_custom_call.1} parent=1 // pred_region
      %49 = dma.done [#allocation3], 512
    $region17: #{tpu_custom_call.1} parent=1 // pred_fallthru
      _
    // Predicated region
    $region18: #{tpu_custom_call.1} parent=1 // pred_check
      _
    $region19: #{tpu_custom_call.1} parent=1 // pred_check_branch
      %51 = sbr.rel (0) target = $region21
    $region20: #{tpu_custom_call.1} parent=1 // pred_region
      %52 = dma.done [#allocation6], 256
    $region21: #{tpu_custom_call.1} parent=1 // pred_fallthru
      _
    // Predicated region
    $region22: #{tpu_custom_call.1} parent=1 // pred_check
      _
    $region23: #{tpu_custom_call.1} parent=1 // pred_check_branch
      %54 = sbr.rel (0) target = $region25
    $region24: #{tpu_custom_call.1} parent=1 // pred_region
      %55 = dma.done [#allocation6], 512
    $region25: #{tpu_custom_call.1} parent=1 // pred_fallthru
      _
    %v59 = vld [vmem:[#allocation2] sm:$0xff]
    %v60 = vld [vmem:[#allocation2 + $0x8] sm:$0xff]
    %v61 = vld [vmem:[#allocation2 + $0x10] sm:$0xff]
    %v62 = vld [vmem:[#allocation2 + $0x18] sm:$0xff]
    %v63 = vld [vmem:[#allocation5] sm:$0xf]
    %v64 = vld [vmem:[#allocation5 + $0x4] sm:$0xf]
    %v65 = vld [vmem:[#allocation5 + $0x8] sm:$0xf]
    %v66 = vld [vmem:[#allocation5 + $0xc] sm:$0xf]
    %v67 = vld [vmem:[#allocation7] sm:$0xff]
    %v68 = vld [vmem:[#allocation7 + $0x8] sm:$0xff]
    %v69 = vld [vmem:[#allocation7 + $0x10] sm:$0xff]
    %v70 = vld [vmem:[#allocation7 + $0x18] sm:$0xff]
    %vm71 = vcmp.gt.bf16.partialorder %v63, 1056980736
    %vm72 = vcmp.gt.bf16.partialorder %v64, 1056980736
    %vm73 = vcmp.gt.bf16.partialorder %v65, 1056980736
    %vm74 = vcmp.gt.bf16.partialorder %v66, 1056980736
    %v75 = vsub.f32 1.0, %v59
    %v76 = vsub.f32 1.0, %v60
    %v77 = vsub.f32 1.0, %v61
    %v78 = vsub.f32 1.0, %v62
    %v79 = vsel %vm71, 65537, 0
    %v80 = vsel %vm72, 65537, 0
    %v81 = vsel %vm73, 65537, 0
    %v82 = vsel %vm74, 65537, 0
    %v83 = vunpack.c.l.b16 %v79
    %v84 = vunpack.c.l.b16 %v80
    %v85 = vunpack.c.l.b16 %v81
    %v86 = vunpack.c.l.b16 %v82
    %vm87 = vcmp.ne.s32.totalorder %v83, 0
    %vm88 = vcmp.ne.s32.totalorder %v84, 0
    %vm89 = vcmp.ne.s32.totalorder %v85, 0
    %vm90 = vcmp.ne.s32.totalorder %v86, 0
    %v91 = vsel %vm87, %v59, %v75
    %v92 = vsel %vm88, %v60, %v76
    %v93 = vsel %vm89, %v61, %v77
    %v94 = vsel %vm90, %v62, %v78
    %v95 = vlog2.pop %v91
    %v96 = vmul.f32 %v95, 0.6931472
    %v97 = vlog2.pop %v92
    %v98 = vmul.f32 %v97, 0.6931472
    %v99 = vlog2.pop %v93
    %v100 = vmul.f32 %v99, 0.6931472
    %v101 = vlog2.pop %v94
    %v102 = vmul.f32 %v101, 0.6931472
    %v103 = vmax.f32 %v96, -100.0
    %v104 = vmax.f32 %v98, -100.0
    %v105 = vmax.f32 %v100, -100.0
    %v106 = vmax.f32 %v102, -100.0
    %v107 = vsub.f32 0.0, %v103
    %v108 = vsub.f32 0.0, %v104
    %v109 = vsub.f32 0.0, %v105
    %v110 = vsub.f32 0.0, %v106
    %v111 = vadd.f32 %v59, 0.001
    %v112 = vadd.f32 %v60, 0.001
    %v113 = vadd.f32 %v61, 0.001
    %v114 = vadd.f32 %v62, 0.001
    %v115 = vmul.f32 %v111, 0.998004
    %v116 = vmul.f32 %v112, 0.998004
    %v117 = vmul.f32 %v113, 0.998004
    %v118 = vmul.f32 %v114, 0.998004
    %v119 = vsub.f32 %v115, %v67
    %v120 = vsub.f32 %v116, %v68
    %v121 = vsub.f32 %v117, %v69
    %v122 = vsub.f32 %v118, %v70
    %v123 = vmul.f32 %v119, 0.5
    %v124 = vmul.f32 %v120, 0.5
    %v125 = vmul.f32 %v121, 0.5
    %v126 = vmul.f32 %v122, 0.5
    %v127 = vmul.f32 %v123, %v119
    %v128 = vmul.f32 %v124, %v120
    %v129 = vmul.f32 %v125, %v121
    %v130 = vmul.f32 %v126, %v122
    %v131 = vsub.f32 %v107, %v127
    %v132 = vsub.f32 %v108, %v128
    %v133 = vsub.f32 %v109, %v129
    %v134 = vsub.f32 %v110, %v130
    %p135 = scmp.eq.s32.totalorder 0, 0
    %p136 = scmp.ne.s32.totalorder 0, 0
    // Predicated region
    $region26: #{tpu_custom_call.1} parent=1 // pred_check
      %p137 = pneg %p136
    $region27: #{tpu_custom_call.1} parent=1 // pred_check_branch
      %139 = sbr.rel (%p137) target = $region29
    $region28: #{tpu_custom_call.1} parent=1 // pred_region
      %v140 = vadd.f32 %v131, %v132
      %v141 = vadd.f32 %v140, %v133
      %v142 = vadd.f32 %v141, %v134
      %143 = vst [vmem:[#allocation8] sm:$0xff] %v142
    $region29: #{tpu_custom_call.1} parent=1 // pred_fallthru
      _
    // Predicated region
    $region30: #{tpu_custom_call.1} parent=1 // pred_check
      %p144 = pneg %p135
    $region31: #{tpu_custom_call.1} parent=1 // pred_check_branch
      %146 = sbr.rel (%p144) target = $region33
    $region32: #{tpu_custom_call.1} parent=1 // pred_region
      %v147 = vlaneseq
      %v148 = vshrl.u32 %v147, 7
      %v149 = vadd.s32 %v148, 8
      %v150 = vadd.s32 %v148, 16
      %v151 = vadd.s32 %v148, 24
      %v152 = vlaneseq
      %v153 = vand.u32 %v152, 127
      %v154 = vmul.u32 %v148, 128
      %v155 = vmul.u32 %v149, 128
      %v156 = vmul.u32 %v150, 128
      %v157 = vmul.u32 %v151, 128
      %v158 = vadd.s32 %v154, %v153
      %v159 = vadd.s32 %v155, %v153
      %v160 = vadd.s32 %v156, %v153
      %v161 = vadd.s32 %v157, %v153
      %vm162 = vcmp.lt.s32.totalorder %v158, 8
      %vm163 = vcmp.lt.s32.totalorder %v159, 8
      %vm164 = vcmp.lt.s32.totalorder %v160, 8
      %vm165 = vcmp.lt.s32.totalorder %v161, 8
      %v166 = vsel %vm162, %v131, 0.0
      %v167 = vsel %vm163, %v132, 0.0
      %v168 = vsel %vm164, %v133, 0.0
      %v169 = vsel %vm165, %v134, 0.0
      %v170 = vadd.f32 %v166, %v167
      %v171 = vadd.f32 %v170, %v168
      %v172 = vadd.f32 %v171, %v169
      %173 = vst [vmem:[#allocation8] sm:$0xff] %v172
    $region33: #{tpu_custom_call.1} parent=1 // pred_fallthru
      _
    // Predicated region
    $region34: #{tpu_custom_call.1} parent=1 // pred_check
      _
    $region35: #{tpu_custom_call.1} parent=1 // pred_check_branch
      %175 = sbr.rel (0) target = $region37
    $region36: #{tpu_custom_call.1} parent=1 // pred_region
      %s177 = ssub.s32 128, 128
      %178 = vsyncadd [#allocation4], %s177
      %s180 = sshll.u32 [#allocation8], 4
      %s181 = int_to_ptr.vmem [resolvable:$true] %s180
      %183 = dma.vmem_to_hbm [thread:$0]  %s181, 128, %s3, [#allocation4]
    $region37: #{tpu_custom_call.1} parent=1 // pred_fallthru
      _
    // Predicated region
    $region38: #{tpu_custom_call.1} parent=1 // pred_check
      _
    $region39: #{tpu_custom_call.1} parent=1 // pred_check_branch
      %185 = sbr.rel (0) target = $region41
    $region40: #{tpu_custom_call.1} parent=1 // pred_region
      %186 = dma.done [#allocation4], 128
    $region41: #{tpu_custom_call.1} parent=1 // pred_fallthru
      _
    %187 = vsyncpa [#allocation3], 1
    %188 = vsyncpa [#allocation6], 1
    %189 = vsyncpa [#allocation4], 1

</llo_original>
